<compile_context>
chip_gen: v6e
topology: v6e:2x2x1
jax: 0.10.0
libtpu: 0.0.40
codegen_flags: <defaults>
</compile_context>

<pallas_src>
import jax
import jax.numpy as jnp
from jax.experimental import pallas as pl
from jax.experimental.pallas import tpu as pltpu

H1 = 256
H2 = 128
LANE = 128
SUBLANE = 8
EPS = 1e-5


def _round_up(x, m):
    return ((x + m - 1) // m) * m


def fcnn_kernel(x_ref, w1_ref, t1_ref, w2_ref, t2_ref, w3_ref, b3_ref, o_ref):
    # Layer 1: Linear + BN folded into (w1', t1'), then ReLU.
    # bf16 matmul operands, f32 accumulation + f32 epilogue.
    h = jnp.dot(x_ref[...], w1_ref[...], preferred_element_type=jnp.float32)
    h = jnp.maximum(h + t1_ref[...], 0.0)
    # Layer 2.
    h = jnp.dot(h.astype(jnp.bfloat16), w2_ref[...],
                preferred_element_type=jnp.float32)
    h = jnp.maximum(h + t2_ref[...], 0.0)
    # Layer 3 (plain Linear).
    out = jnp.dot(h.astype(jnp.bfloat16), w3_ref[...],
                  preferred_element_type=jnp.float32)
    o_ref[...] = out + b3_ref[...]


def fcnn_forward(x, params, *, block_m=512):
    """Fused forward pass (eval-mode BN). x: [N, dim_in] float32."""
    (w1, b1, g1, be1, rm1, rv1,
     w2, b2, g2, be2, rm2, rv2,
     w3, b3) = params

    n, dim_in = x.shape
    dim_out = w3.shape[1]

    # Fold eval-mode BatchNorm1d and the Linear bias into the weights:
    #   relu(((x@w + b) - rm) * s + be)  with  s = g / sqrt(rv + eps)
    # = relu(x @ (w * s) + (b - rm) * s + be)
    s1 = g1 / jnp.sqrt(rv1 + EPS)
    w1f = w1 * s1[None, :]
    t1 = (b1 - rm1) * s1 + be1
    s2 = g2 / jnp.sqrt(rv2 + EPS)
    w2f = w2 * s2[None, :]
    t2 = (b2 - rm2) * s2 + be2

    # Pad feature dims to the 128-lane width (unmasked loads/stores, full MXU K).
    k_p = _round_up(dim_in, LANE)
    o_p = _round_up(dim_out, LANE)

    # Batch tile: large enough to amortize per-step pipeline overhead, small
    # enough to stay well inside v7x's 64 MiB VMEM (≈2 MiB/step here).
    tm = min(block_m, _round_up(n, SUBLANE))
    n_p = _round_up(n, tm)

    x_p = (jnp.zeros((n_p, k_p), jnp.bfloat16)
           .at[:n, :dim_in].set(x.astype(jnp.bfloat16)))
    w1_p = (jnp.zeros((k_p, H1), jnp.bfloat16)
            .at[:dim_in, :].set(w1f.astype(jnp.bfloat16)))
    w2_p = w2f.astype(jnp.bfloat16)
    w3_p = (jnp.zeros((H2, o_p), jnp.bfloat16)
            .at[:, :dim_out].set(w3.astype(jnp.bfloat16)))
    b3_p = (jnp.zeros((1, o_p), jnp.float32)
            .at[0, :dim_out].set(b3.astype(jnp.float32)))

    row = lambda v: v.reshape(1, -1).astype(jnp.float32)
    const = lambda i: (0, 0)  # weights/vectors: resident across all batch tiles

    grid = (pl.cdiv(n_p, tm),)

    out = pl.pallas_call(
        fcnn_kernel,
        out_shape=jax.ShapeDtypeStruct((n_p, o_p), jnp.float32),
        grid=grid,
        in_specs=[
            pl.BlockSpec((tm, k_p), lambda i: (i, 0)),   # x tile (streamed)
            pl.BlockSpec((k_p, H1), const),              # w1 (BN-folded)
            pl.BlockSpec((1, H1), const),                # t1
            pl.BlockSpec((H1, H2), const),               # w2 (BN-folded)
            pl.BlockSpec((1, H2), const),                # t2
            pl.BlockSpec((H2, o_p), const),              # w3
            pl.BlockSpec((1, o_p), const),               # b3
        ],
        out_specs=pl.BlockSpec((tm, o_p), lambda i: (i, 0)),
        compiler_params=pltpu.CompilerParams(
            dimension_semantics=("parallel",),
            vmem_limit_bytes=64 * 1024 * 1024,
        ),
    )(x_p, w1_p, row(t1), w2_p, row(t2), w3_p, b3_p)

    return out[:n, :dim_out]


def init_params(key, dim_in, dim_out):
    """Deterministic init mimicking PyTorch Linear defaults (uniform +/- 1/sqrt(fan_in));
    BatchNorm1d init: gamma=1, beta=0, running_mean=0, running_var=1."""
    ks = jax.random.split(key, 6)

    def linear(kw, kb, fan_in, fan_out):
        bound = 1.0 / jnp.sqrt(fan_in)
        w = jax.random.uniform(kw, (fan_in, fan_out), jnp.float32, -bound, bound)
        b = jax.random.uniform(kb, (fan_out,), jnp.float32, -bound, bound)
        return w, b

    w1, b1 = linear(ks[0], ks[1], dim_in, H1)
    w2, b2 = linear(ks[2], ks[3], H1, H2)
    w3, b3 = linear(ks[4], ks[5], H2, dim_out)

    g1, be1 = jnp.ones((H1,), jnp.float32), jnp.zeros((H1,), jnp.float32)
    rm1, rv1 = jnp.zeros((H1,), jnp.float32), jnp.ones((H1,), jnp.float32)
    g2, be2 = jnp.ones((H2,), jnp.float32), jnp.zeros((H2,), jnp.float32)
    rm2, rv2 = jnp.zeros((H2,), jnp.float32), jnp.ones((H2,), jnp.float32)

    return (w1, b1, g1, be1, rm1, rv1,
            w2, b2, g2, be2, rm2, rv2,
            w3, b3)


def fcnn_reference(x, params):
    """Pure-JAX f32 reference (eval-mode BN)."""
    (w1, b1, g1, be1, rm1, rv1,
     w2, b2, g2, be2, rm2, rv2,
     w3, b3) = params
    h = x @ w1 + b1
    h = (h - rm1) / jnp.sqrt(rv1 + EPS) * g1 + be1
    h = jnp.maximum(h, 0.0)
    h = h @ w2 + b2
    h = (h - rm2) / jnp.sqrt(rv2 + EPS) * g2 + be2
    h = jnp.maximum(h, 0.0)
    return h @ w3 + b3


if __name__ == "__main__":
    key = jax.random.PRNGKey(0)
    k_param, k_x1, k_x2 = jax.random.split(key, 3)

    dim_in, dim_out = 32, 8
    params = init_params(k_param, dim_in, dim_out)

    # Small case: single grid step.
    batch = 8
    x = jax.random.normal(k_x1, (batch, dim_in), jnp.float32)
    y = jax.block_until_ready(fcnn_forward(x, params))
    y_ref = fcnn_reference(x, params)
    assert y.shape == (batch, dim_out)
    # bf16 matmul operands -> looser tolerance than pure-f32.
    assert jnp.allclose(y, y_ref, atol=5e-2, rtol=5e-2), "mismatch vs reference (small)"

    # Larger case: exercises the batch grid (grid > 1) and row padding.
    batch2 = 300
    x2 = jax.random.normal(k_x2, (batch2, dim_in), jnp.float32)
    y2 = jax.block_until_ready(fcnn_forward(x2, params, block_m=128))
    y2_ref = fcnn_reference(x2, params)
    assert y2.shape == (batch2, dim_out)
    assert jnp.allclose(y2, y2_ref, atol=5e-2, rtol=5e-2), "mismatch vs reference (tiled)"

    print("KERNEL_OK")
</pallas_src>

<mosaic_0001>
module attributes {stable_mosaic.version = 11 : i64} {
  func.func @fcnn_kernel(%arg0: i32, %arg1: memref<8x128xbf16, #tpu.memory_space<vmem>>, %arg2: memref<128x256xbf16, #tpu.memory_space<vmem>>, %arg3: memref<1x256xf32, #tpu.memory_space<vmem>>, %arg4: memref<256x128xbf16, #tpu.memory_space<vmem>>, %arg5: memref<1x128xf32, #tpu.memory_space<vmem>>, %arg6: memref<128x128xbf16, #tpu.memory_space<vmem>>, %arg7: memref<1x128xf32, #tpu.memory_space<vmem>>, %arg8: memref<8x128xf32, #tpu.memory_space<vmem>>) attributes {dimension_semantics = [#tpu.dimension_semantics<parallel>], iteration_bounds = array<i64: 1>, scalar_prefetch = 0 : i64, scratch_operands = 0 : i64, tpu.core_type = #tpu.core_type<tc>, window_params = [{transform_indices = @transform_0, window_bounds = array<i64: 8, 128>}, {pipeline_mode = #tpu.pipeline_mode<synchronous>, transform_indices = @transform_1, window_bounds = array<i64: 128, 256>}, {pipeline_mode = #tpu.pipeline_mode<synchronous>, transform_indices = @transform_2, window_bounds = array<i64: 1, 256>}, {pipeline_mode = #tpu.pipeline_mode<synchronous>, transform_indices = @transform_3, window_bounds = array<i64: 256, 128>}, {pipeline_mode = #tpu.pipeline_mode<synchronous>, transform_indices = @transform_4, window_bounds = array<i64: 1, 128>}, {pipeline_mode = #tpu.pipeline_mode<synchronous>, transform_indices = @transform_5, window_bounds = array<i64: 128, 128>}, {pipeline_mode = #tpu.pipeline_mode<synchronous>, transform_indices = @transform_6, window_bounds = array<i64: 1, 128>}, {transform_indices = @transform_7, window_bounds = array<i64: 8, 128>}]} {
    %c0 = arith.constant 0 : index
    %c0_0 = arith.constant 0 : index
    %0 = vector.load %arg1[%c0, %c0_0] : memref<8x128xbf16, #tpu.memory_space<vmem>>, vector<8x128xbf16>
    %c0_1 = arith.constant 0 : index
    %c0_2 = arith.constant 0 : index
    %1 = vector.load %arg2[%c0_1, %c0_2] : memref<128x256xbf16, #tpu.memory_space<vmem>>, vector<128x256xbf16>
    %cst = arith.constant dense<0.000000e+00> : vector<8x256xf32>
    %2 = tpu.matmul %0, %1, %cst {dimension_numbers = #tpu.dot_dimension_numbers<[1], [0], [0], [1], [0, 0, 1, 1], [], []>} : vector<8x128xbf16>, vector<128x256xbf16>, vector<8x256xf32> -> vector<8x256xf32>
    %c0_3 = arith.constant 0 : index
    %c0_4 = arith.constant 0 : index
    %3 = vector.load %arg3[%c0_3, %c0_4] : memref<1x256xf32, #tpu.memory_space<vmem>>, vector<1x256xf32>
    %4 = vector.broadcast %3 : vector<1x256xf32> to vector<8x256xf32>
    %5 = arith.addf %2, %4 : vector<8x256xf32>
    %cst_5 = arith.constant 0.000000e+00 : f32
    %6 = vector.broadcast %cst_5 : f32 to vector<8x256xf32>
    %7 = arith.maximumf %5, %6 : vector<8x256xf32>
    %8 = arith.truncf %7 : vector<8x256xf32> to vector<8x256xbf16>
    %c0_6 = arith.constant 0 : index
    %c0_7 = arith.constant 0 : index
    %9 = vector.load %arg4[%c0_6, %c0_7] : memref<256x128xbf16, #tpu.memory_space<vmem>>, vector<256x128xbf16>
    %cst_8 = arith.constant dense<0.000000e+00> : vector<8x128xf32>
    %10 = tpu.matmul %8, %9, %cst_8 {dimension_numbers = #tpu.dot_dimension_numbers<[1], [0], [0], [1], [0, 0, 1, 1], [], []>} : vector<8x256xbf16>, vector<256x128xbf16>, vector<8x128xf32> -> vector<8x128xf32>
    %c0_9 = arith.constant 0 : index
    %c0_10 = arith.constant 0 : index
    %11 = vector.load %arg5[%c0_9, %c0_10] : memref<1x128xf32, #tpu.memory_space<vmem>>, vector<1x128xf32>
    %12 = vector.broadcast %11 : vector<1x128xf32> to vector<8x128xf32>
    %13 = arith.addf %10, %12 : vector<8x128xf32>
    %cst_11 = arith.constant 0.000000e+00 : f32
    %14 = vector.broadcast %cst_11 : f32 to vector<8x128xf32>
    %15 = arith.maximumf %13, %14 : vector<8x128xf32>
    %16 = arith.truncf %15 : vector<8x128xf32> to vector<8x128xbf16>
    %c0_12 = arith.constant 0 : index
    %c0_13 = arith.constant 0 : index
    %17 = vector.load %arg6[%c0_12, %c0_13] : memref<128x128xbf16, #tpu.memory_space<vmem>>, vector<128x128xbf16>
    %cst_14 = arith.constant dense<0.000000e+00> : vector<8x128xf32>
    %18 = tpu.matmul %16, %17, %cst_14 {dimension_numbers = #tpu.dot_dimension_numbers<[1], [0], [0], [1], [0, 0, 1, 1], [], []>} : vector<8x128xbf16>, vector<128x128xbf16>, vector<8x128xf32> -> vector<8x128xf32>
    %c0_15 = arith.constant 0 : index
    %c0_16 = arith.constant 0 : index
    %19 = vector.load %arg7[%c0_15, %c0_16] : memref<1x128xf32, #tpu.memory_space<vmem>>, vector<1x128xf32>
    %20 = vector.broadcast %19 : vector<1x128xf32> to vector<8x128xf32>
    %21 = arith.addf %18, %20 : vector<8x128xf32>
    %c0_17 = arith.constant 0 : index
    %c0_18 = arith.constant 0 : index
    %22 = vector.load %arg8[%c0_17, %c0_18] : memref<8x128xf32, #tpu.memory_space<vmem>>, vector<8x128xf32>
    tpu.vector_store %arg8[%c0_17, %c0_18], %21 {strides = array<i32>} : memref<8x128xf32, #tpu.memory_space<vmem>>, vector<8x128xf32>,
    return
  }
  func.func @transform_0(%arg0: i32) -> (i32, i32) {
    %c0_i32 = arith.constant 0 : i32
    %c0_i32_0 = arith.constant 0 : i32
    return %arg0, %c0_i32 : i32, i32
  }
  func.func @transform_1(%arg0: i32) -> (i32, i32) {
    %c0_i32 = arith.constant 0 : i32
    %c0_i32_0 = arith.constant 0 : i32
    %c0_i32_1 = arith.constant 0 : i32
    return %c0_i32, %c0_i32_0 : i32, i32
  }
  func.func @transform_2(%arg0: i32) -> (i32, i32) {
    %c0_i32 = arith.constant 0 : i32
    %c0_i32_0 = arith.constant 0 : i32
    %c0_i32_1 = arith.constant 0 : i32
    return %c0_i32, %c0_i32_0 : i32, i32
  }
  func.func @transform_3(%arg0: i32) -> (i32, i32) {
    %c0_i32 = arith.constant 0 : i32
    %c0_i32_0 = arith.constant 0 : i32
    %c0_i32_1 = arith.constant 0 : i32
    return %c0_i32, %c0_i32_0 : i32, i32
  }
  func.func @transform_4(%arg0: i32) -> (i32, i32) {
    %c0_i32 = arith.constant 0 : i32
    %c0_i32_0 = arith.constant 0 : i32
    %c0_i32_1 = arith.constant 0 : i32
    return %c0_i32, %c0_i32_0 : i32, i32
  }
  func.func @transform_5(%arg0: i32) -> (i32, i32) {
    %c0_i32 = arith.constant 0 : i32
    %c0_i32_0 = arith.constant 0 : i32
    %c0_i32_1 = arith.constant 0 : i32
    return %c0_i32, %c0_i32_0 : i32, i32
  }
  func.func @transform_6(%arg0: i32) -> (i32, i32) {
    %c0_i32 = arith.constant 0 : i32
    %c0_i32_0 = arith.constant 0 : i32
    %c0_i32_1 = arith.constant 0 : i32
    return %c0_i32, %c0_i32_0 : i32, i32
  }
  func.func @transform_7(%arg0: i32) -> (i32, i32) {
    %c0_i32 = arith.constant 0 : i32
    %c0_i32_0 = arith.constant 0 : i32
    return %arg0, %c0_i32 : i32, i32
  }
}

</mosaic_0001>

<llo_original>
// kernel: tpu_custom_call.1
$region0: #{tpu_custom_call.1}
  #allocation0 [shape = 'u32[]', space=smem, size = 0x4, offset = 0x4, fixed_abs, tag = 'smem constant byte address 0x4 - core index']
  #allocation1 [shape = 'u32[144,128]{1,0:T(1,128)}', space=vmem, size = 0x12000, scoped, tag = 'internal scratch']
  %s0 = inlined_call_operand.hbm [shape: bf16[8,128], index: 0, kind: input, shape index: {}]
  %s1 = inlined_call_operand.hbm [shape: bf16[128,256], index: 1, kind: input, shape index: {}]
  %s2 = inlined_call_operand.vmem [shape: f32[1,256], index: 2, kind: input, shape index: {}]
  %s3 = inlined_call_operand.hbm [shape: bf16[256,128], index: 3, kind: input, shape index: {}]
  %s4 = inlined_call_operand.vmem [shape: f32[1,128], index: 4, kind: input, shape index: {}]
  %s5 = inlined_call_operand.hbm [shape: bf16[128,128], index: 5, kind: input, shape index: {}]
  %s6 = inlined_call_operand.vmem [shape: f32[1,128], index: 6, kind: input, shape index: {}]
  %s7 = inlined_call_operand.hbm [shape: f32[8,128], index: 7, kind: output, shape index: {}]
  %s8 = sld [smem:[#allocation0]]
  $region54: #{tpu_custom_call.1} parent=0
    _
  %s10 = ssub.s32 1, %s8
  %s11 = scalar_select 0, %s10, %s8
  $region1: #{tpu_custom_call.1} parent=0
    #allocation2 [shape = 'u8[2048]{0}', space=vmem, size = 0x800, scoped, tag = 'input window, operand 0, single buffered']
    #allocation3 [shape = 's32[1]{0}', space=sflag, size = 0x4, scoped, tag = 'scoped memory for tpu_custom_call.1']
    #allocation4 [shape = 's32[1]{0}', space=sflag, size = 0x4, scoped, tag = 'scoped memory for tpu_custom_call.1']
    #allocation5 [shape = 'u8[65536]{0}', space=vmem, size = 0x10000, scoped, tag = 'input window, operand 1, single buffered']
    #allocation6 [shape = 's32[1]{0}', space=sflag, size = 0x4, scoped, tag = 'scoped memory for tpu_custom_call.1']
    #allocation7 [shape = 'u8[65536]{0}', space=vmem, size = 0x10000, scoped, tag = 'input window, operand 3, single buffered']
    #allocation8 [shape = 'u8[32768]{0}', space=vmem, size = 0x8000, scoped, tag = 'input window, operand 5, single buffered']
    #allocation9 [shape = 's32[1]{0}', space=sflag, size = 0x4, scoped, tag = 'scoped memory for tpu_custom_call.1']
    #allocation10 [shape = 'u8[4096]{0}', space=vmem, size = 0x1000, scoped, tag = 'output window, operand 0, single buffered']
    %12 = vsyncpa [#allocation3], 0
    %13 = vsyncpa [#allocation6], 0
    %14 = vsyncpa [#allocation9], 0
    %15 = vsyncpa [#allocation4], 0
    // Predicated region
    $region2: #{tpu_custom_call.1} parent=1 // pred_check
      _
    $region3: #{tpu_custom_call.1} parent=1 // pred_check_branch
      %17 = sbr.rel (0) target = $region5
    $region4: #{tpu_custom_call.1} parent=1 // pred_region
      %s19 = ssub.s32 64, 64
      %20 = vsyncadd [#allocation3], %s19
      %s22 = sshll.u32 [#allocation2], 4
      %s23 = int_to_ptr.vmem [resolvable:$true] %s22
      %25 = dma.hbm_to_vmem [thread:$0]  %s0, 64, %s23, [#allocation3]
    $region5: #{tpu_custom_call.1} parent=1 // pred_fallthru
      _
    // Predicated region
    $region6: #{tpu_custom_call.1} parent=1 // pred_check
      _
    $region7: #{tpu_custom_call.1} parent=1 // pred_check_branch
      %27 = sbr.rel (0) target = $region9
    $region8: #{tpu_custom_call.1} parent=1 // pred_region
      %s29 = ssub.s32 2048, 2048
      %30 = vsyncadd [#allocation6], %s29
      %s31 = sshll.u32 [#allocation5], 4
      %s32 = int_to_ptr.vmem [resolvable:$true] %s31
      %37 = dma.hbm_to_vmem [thread:$0]  %s1, 2048, %s32, [#allocation6], 128, 128, 8
    $region9: #{tpu_custom_call.1} parent=1 // pred_fallthru
      _
    // Predicated region
    $region10: #{tpu_custom_call.1} parent=1 // pred_check
      _
    $region11: #{tpu_custom_call.1} parent=1 // pred_check_branch
      %39 = sbr.rel (0) target = $region13
    $region12: #{tpu_custom_call.1} parent=1 // pred_region
      _
    $region13: #{tpu_custom_call.1} parent=1 // pred_fallthru
      _
    // Predicated region
    $region14: #{tpu_custom_call.1} parent=1 // pred_check
      _
    $region15: #{tpu_custom_call.1} parent=1 // pred_check_branch
      %41 = sbr.rel (0) target = $region17
    $region16: #{tpu_custom_call.1} parent=1 // pred_region
      %s43 = ssub.s32 2048, 2048
      %44 = vsyncadd [#allocation6], %s43
      %s45 = sshll.u32 [#allocation7], 4
      %s46 = int_to_ptr.vmem [resolvable:$true] %s45
      %51 = dma.hbm_to_vmem [thread:$0]  %s3, 2048, %s46, [#allocation6], 64, 64, 4
    $region17: #{tpu_custom_call.1} parent=1 // pred_fallthru
      _
    // Predicated region
    $region18: #{tpu_custom_call.1} parent=1 // pred_check
      _
    $region19: #{tpu_custom_call.1} parent=1 // pred_check_branch
      %53 = sbr.rel (0) target = $region21
    $region20: #{tpu_custom_call.1} parent=1 // pred_region
      _
    $region21: #{tpu_custom_call.1} parent=1 // pred_fallthru
      _
    // Predicated region
    $region22: #{tpu_custom_call.1} parent=1 // pred_check
      _
    $region23: #{tpu_custom_call.1} parent=1 // pred_check_branch
      %55 = sbr.rel (0) target = $region25
    $region24: #{tpu_custom_call.1} parent=1 // pred_region
      %s57 = ssub.s32 1024, 1024
      %58 = vsyncadd [#allocation9], %s57
      %s59 = sshll.u32 [#allocation8], 4
      %s60 = int_to_ptr.vmem [resolvable:$true] %s59
      %65 = dma.hbm_to_vmem [thread:$0]  %s5, 1024, %s60, [#allocation9], 64, 64, 4
    $region25: #{tpu_custom_call.1} parent=1 // pred_fallthru
      _
    // Predicated region
    $region26: #{tpu_custom_call.1} parent=1 // pred_check
      _
    $region27: #{tpu_custom_call.1} parent=1 // pred_check_branch
      %67 = sbr.rel (0) target = $region29
    $region28: #{tpu_custom_call.1} parent=1 // pred_region
      _
    $region29: #{tpu_custom_call.1} parent=1 // pred_fallthru
      _
    // Predicated region
    $region30: #{tpu_custom_call.1} parent=1 // pred_check
      _
    $region31: #{tpu_custom_call.1} parent=1 // pred_check_branch
      %69 = sbr.rel (0) target = $region33
    $region32: #{tpu_custom_call.1} parent=1 // pred_region
      %70 = dma.done [#allocation3], 64
    $region33: #{tpu_custom_call.1} parent=1 // pred_fallthru
      _
    // Predicated region
    $region34: #{tpu_custom_call.1} parent=1 // pred_check
      _
    $region35: #{tpu_custom_call.1} parent=1 // pred_check_branch
      %72 = sbr.rel (0) target = $region37
    $region36: #{tpu_custom_call.1} parent=1 // pred_region
      %73 = dma.done [#allocation6], 2048
    $region37: #{tpu_custom_call.1} parent=1 // pred_fallthru
      _
    // Predicated region
    $region38: #{tpu_custom_call.1} parent=1 // pred_check
      _
    $region39: #{tpu_custom_call.1} parent=1 // pred_check_branch
      %75 = sbr.rel (0) target = $region41
    $region40: #{tpu_custom_call.1} parent=1 // pred_region
      %76 = dma.done [#allocation6], 2048
    $region41: #{tpu_custom_call.1} parent=1 // pred_fallthru
      _
    // Predicated region
    $region42: #{tpu_custom_call.1} parent=1 // pred_check
      _
    $region43: #{tpu_custom_call.1} parent=1 // pred_check_branch
      %78 = sbr.rel (0) target = $region45
    $region44: #{tpu_custom_call.1} parent=1 // pred_region
      %79 = dma.done [#allocation9], 1024
    $region45: #{tpu_custom_call.1} parent=1 // pred_fallthru
      _
    %v81 = vld [vmem:[#allocation2] sm:$0xf]
    %v82 = vld [vmem:[#allocation5] sm:$0xff]
    %v83 = vld [vmem:[#allocation5 + $0x8] sm:$0xff]
    %v84 = vld [vmem:[#allocation5 + $0x10] sm:$0xff]
    %v85 = vld [vmem:[#allocation5 + $0x18] sm:$0xff]
    %v86 = vld [vmem:[#allocation5 + $0x20] sm:$0xff]
    %v87 = vld [vmem:[#allocation5 + $0x28] sm:$0xff]
    %v88 = vld [vmem:[#allocation5 + $0x30] sm:$0xff]
    %v89 = vld [vmem:[#allocation5 + $0x38] sm:$0xff]
    %v90 = vld [vmem:[#allocation5 + $0x40] sm:$0xff]
    %v91 = vld [vmem:[#allocation5 + $0x48] sm:$0xff]
    %v92 = vld [vmem:[#allocation5 + $0x50] sm:$0xff]
    %v93 = vld [vmem:[#allocation5 + $0x58] sm:$0xff]
    %v94 = vld [vmem:[#allocation5 + $0x60] sm:$0xff]
    %v95 = vld [vmem:[#allocation5 + $0x68] sm:$0xff]
    %v96 = vld [vmem:[#allocation5 + $0x70] sm:$0xff]
    %v97 = vld [vmem:[#allocation5 + $0x78] sm:$0xff]
    %v98 = vld [vmem:[%s2] sm:$0x3]
    %v100 = vlaneseq
    %v101 = vshrl.u32 %v100, 7
    %v102 = vsub.s32 0, %v101
    %v103 = vrot.slane %v98, %v102
    %v104 = vlaneseq
    %v105 = vshrl.u32 %v104, 7
    %v106 = vsub.s32 1, %v105
    %v107 = vrot.slane %v98, %v106
    %v126 = vunpack.c.l.b16 %v82
    %v127 = vunpack.c.h.b16 %v82
    %v128 = vunpack.c.l.b16 %v83
    %v129 = vunpack.c.h.b16 %v83
    %v130 = vunpack.c.l.b16 %v84
    %v131 = vunpack.c.h.b16 %v84
    %v132 = vunpack.c.l.b16 %v85
    %v133 = vunpack.c.h.b16 %v85
    %v134 = vunpack.c.l.b16 %v86
    %v135 = vunpack.c.h.b16 %v86
    %v136 = vunpack.c.l.b16 %v87
    %v137 = vunpack.c.h.b16 %v87
    %v138 = vunpack.c.l.b16 %v88
    %v139 = vunpack.c.h.b16 %v88
    %v140 = vunpack.c.l.b16 %v89
    %v141 = vunpack.c.h.b16 %v89
    %v142 = vunpack.c.l.b16 %v90
    %v143 = vunpack.c.h.b16 %v90
    %v144 = vunpack.c.l.b16 %v91
    %v145 = vunpack.c.h.b16 %v91
    %v146 = vunpack.c.l.b16 %v92
    %v147 = vunpack.c.h.b16 %v92
    %v148 = vunpack.c.l.b16 %v93
    %v149 = vunpack.c.h.b16 %v93
    %v150 = vunpack.c.l.b16 %v94
    %v151 = vunpack.c.h.b16 %v94
    %v152 = vunpack.c.l.b16 %v95
    %v153 = vunpack.c.h.b16 %v95
    %v154 = vunpack.c.l.b16 %v96
    %v155 = vunpack.c.h.b16 %v96
    %v156 = vunpack.c.l.b16 %v97
    %v157 = vunpack.c.h.b16 %v97
    %v158 = vpack.c.b16 %v128, %v126
    %v159 = vpack.c.b16 %v129, %v127
    %v160 = vpack.c.b16 %v132, %v130
    %v161 = vpack.c.b16 %v133, %v131
    %v162 = vpack.c.b16 %v136, %v134
    %v163 = vpack.c.b16 %v137, %v135
    %v164 = vpack.c.b16 %v140, %v138
    %v165 = vpack.c.b16 %v141, %v139
    %v166 = vpack.c.b16 %v144, %v142
    %v167 = vpack.c.b16 %v145, %v143
    %v168 = vpack.c.b16 %v148, %v146
    %v169 = vpack.c.b16 %v149, %v147
    %v170 = vpack.c.b16 %v152, %v150
    %v171 = vpack.c.b16 %v153, %v151
    %v172 = vpack.c.b16 %v156, %v154
    %v173 = vpack.c.b16 %v157, %v155
    %190 = vmatprep.subr.bf16.mxu0 %v173
    %191 = vmatpush1.bf16.msra.mxu0 %v172
    %192 = vmatprep.subr.bf16.mxu0 %v171
    %193 = vmatpush1.bf16.msra.mxu0 %v170
    %194 = vmatprep.subr.bf16.mxu0 %v169
    %195 = vmatpush1.bf16.msra.mxu0 %v168
    %196 = vmatprep.subr.bf16.mxu0 %v167
    %197 = vmatpush1.bf16.msra.mxu0 %v166
    %198 = vmatprep.subr.bf16.mxu0 %v165
    %199 = vmatpush1.bf16.msra.mxu0 %v164
    %200 = vmatprep.subr.bf16.mxu0 %v163
    %201 = vmatpush1.bf16.msra.mxu0 %v162
    %202 = vmatprep.subr.bf16.mxu0 %v161
    %203 = vmatpush1.bf16.msra.mxu0 %v160
    %204 = vmatprep.subr.bf16.mxu0 %v159
    %205 = vmatpush1.bf16.msra.mxu0 %v158
    %206 = vmatprep.subr.bf16.mxu0 0
    %207 = vmatpush2.bf16.msra.mxu0 0
    %208 = vmatprep.subr.bf16.mxu0 0
    %209 = vmatpush2.bf16.msra.mxu0 0
    %210 = vmatprep.subr.bf16.mxu0 0
    %211 = vmatpush2.bf16.msra.mxu0 0
    %212 = vmatprep.subr.bf16.mxu0 0
    %213 = vmatpush2.bf16.msra.mxu0 0
    %214 = vmatprep.subr.bf16.mxu0 0
    %215 = vmatpush2.bf16.msra.mxu0 0
    %216 = vmatprep.subr.bf16.mxu0 0
    %217 = vmatpush2.bf16.msra.mxu0 0
    %218 = vmatprep.subr.bf16.mxu0 0
    %219 = vmatpush2.bf16.msra.mxu0 0
    %220 = vmatprep.subr.bf16.mxu0 0
    %221 = vmatpush2.bf16.msra.mxu0 0
    %222 = vmatprep.mubr.bf16.mxu0 0
    %223 = vmatmul.mubr.bf16.gmra.mxu0 %v81
    %v224 = vpop.f32.mrf.mxu0
    %v225 = vadd.f32 %v103, %v224
    %v226 = vpop.f32.mrf.mxu0
    %v227 = vadd.f32 %v107, %v226
    %v228 = vpop.f32.mrf.mxu0
    %v229 = vpop.f32.mrf.mxu0
    %230 = vdwg.mxu0
    %v231 = vmax.f32 %v225, 0.0
    %v232 = vmax.f32 %v227, 0.0
    %v233 = vpack.c.bf16 %v231, %v231
    %v234 = vpack.c.bf16 %v232, %v232
    %v235 = vld [vmem:[#allocation7] sm:$0xf]
    %v236 = vld [vmem:[#allocation7 + $0x4] sm:$0xf]
    %v237 = vld [vmem:[#allocation7 + $0x8] sm:$0xf]
    %v238 = vld [vmem:[#allocation7 + $0xc] sm:$0xf]
    %v239 = vld [vmem:[#allocation7 + $0x10] sm:$0xf]
    %v240 = vld [vmem:[#allocation7 + $0x14] sm:$0xf]
    %v241 = vld [vmem:[#allocation7 + $0x18] sm:$0xf]
    %v242 = vld [vmem:[#allocation7 + $0x1c] sm:$0xf]
    %v243 = vld [vmem:[#allocation7 + $0x20] sm:$0xf]
    %v244 = vld [vmem:[#allocation7 + $0x24] sm:$0xf]
    %v245 = vld [vmem:[#allocation7 + $0x28] sm:$0xf]
    %v246 = vld [vmem:[#allocation7 + $0x2c] sm:$0xf]
    %v247 = vld [vmem:[#allocation7 + $0x30] sm:$0xf]
    %v248 = vld [vmem:[#allocation7 + $0x34] sm:$0xf]
    %v249 = vld [vmem:[#allocation7 + $0x38] sm:$0xf]
    %v250 = vld [vmem:[#allocation7 + $0x3c] sm:$0xf]
    %v251 = vld [vmem:[#allocation7 + $0x40] sm:$0xf]
    %v252 = vld [vmem:[#allocation7 + $0x44] sm:$0xf]
    %v253 = vld [vmem:[#allocation7 + $0x48] sm:$0xf]
    %v254 = vld [vmem:[#allocation7 + $0x4c] sm:$0xf]
    %v255 = vld [vmem:[#allocation7 + $0x50] sm:$0xf]
    %v256 = vld [vmem:[#allocation7 + $0x54] sm:$0xf]
    %v257 = vld [vmem:[#allocation7 + $0x58] sm:$0xf]
    %v258 = vld [vmem:[#allocation7 + $0x5c] sm:$0xf]
    %v259 = vld [vmem:[#allocation7 + $0x60] sm:$0xf]
    %v260 = vld [vmem:[#allocation7 + $0x64] sm:$0xf]
    %v261 = vld [vmem:[#allocation7 + $0x68] sm:$0xf]
    %v262 = vld [vmem:[#allocation7 + $0x6c] sm:$0xf]
    %v263 = vld [vmem:[#allocation7 + $0x70] sm:$0xf]
    %v264 = vld [vmem:[#allocation7 + $0x74] sm:$0xf]
    %v265 = vld [vmem:[#allocation7 + $0x78] sm:$0xf]
    %v266 = vld [vmem:[#allocation7 + $0x7c] sm:$0xf]
    %v267 = vld [vmem:[%s4] sm:$0x1]
    %v269 = vlaneseq
    %v270 = vshrl.u32 %v269, 7
    %v271 = vsub.s32 0, %v270
    %v272 = vrot.slane %v267, %v271
    %v306 = vunpack.c.l.b16 %v235
    %v307 = vunpack.c.l.b16 %v236
    %v308 = vunpack.c.l.b16 %v237
    %v309 = vunpack.c.l.b16 %v238
    %v310 = vunpack.c.l.b16 %v239
    %v311 = vunpack.c.l.b16 %v240
    %v312 = vunpack.c.l.b16 %v241
    %v313 = vunpack.c.l.b16 %v242
    %v314 = vunpack.c.l.b16 %v243
    %v315 = vunpack.c.l.b16 %v244
    %v316 = vunpack.c.l.b16 %v245
    %v317 = vunpack.c.l.b16 %v246
    %v318 = vunpack.c.l.b16 %v247
    %v319 = vunpack.c.l.b16 %v248
    %v320 = vunpack.c.l.b16 %v249
    %v321 = vunpack.c.l.b16 %v250
    %v322 = vunpack.c.l.b16 %v251
    %v323 = vunpack.c.l.b16 %v252
    %v324 = vunpack.c.l.b16 %v253
    %v325 = vunpack.c.l.b16 %v254
    %v326 = vunpack.c.l.b16 %v255
    %v327 = vunpack.c.l.b16 %v256
    %v328 = vunpack.c.l.b16 %v257
    %v329 = vunpack.c.l.b16 %v258
    %v330 = vunpack.c.l.b16 %v259
    %v331 = vunpack.c.l.b16 %v260
    %v332 = vunpack.c.l.b16 %v261
    %v333 = vunpack.c.l.b16 %v262
    %v334 = vunpack.c.l.b16 %v263
    %v335 = vunpack.c.l.b16 %v264
    %v336 = vunpack.c.l.b16 %v265
    %v337 = vunpack.c.l.b16 %v266
    %v338 = vpack.c.b16 %v307, %v306
    %v339 = vpack.c.b16 %v309, %v308
    %v340 = vpack.c.b16 %v311, %v310
    %v341 = vpack.c.b16 %v313, %v312
    %v342 = vpack.c.b16 %v315, %v314
    %v343 = vpack.c.b16 %v317, %v316
    %v344 = vpack.c.b16 %v319, %v318
    %v345 = vpack.c.b16 %v321, %v320
    %v346 = vpack.c.b16 %v323, %v322
    %v347 = vpack.c.b16 %v325, %v324
    %v348 = vpack.c.b16 %v327, %v326
    %v349 = vpack.c.b16 %v329, %v328
    %v350 = vpack.c.b16 %v331, %v330
    %v351 = vpack.c.b16 %v333, %v332
    %v352 = vpack.c.b16 %v335, %v334
    %v353 = vpack.c.b16 %v337, %v336
    %370 = vmatprep.subr.bf16.mxu0 0
    %371 = vmatpush1.bf16.msra.mxu0 %v345
    %372 = vmatprep.subr.bf16.mxu0 0
    %373 = vmatpush1.bf16.msra.mxu0 %v344
    %374 = vmatprep.subr.bf16.mxu0 0
    %375 = vmatpush1.bf16.msra.mxu0 %v343
    %376 = vmatprep.subr.bf16.mxu0 0
    %377 = vmatpush1.bf16.msra.mxu0 %v342
    %378 = vmatprep.subr.bf16.mxu0 0
    %379 = vmatpush1.bf16.msra.mxu0 %v341
    %380 = vmatprep.subr.bf16.mxu0 0
    %381 = vmatpush1.bf16.msra.mxu0 %v340
    %382 = vmatprep.subr.bf16.mxu0 0
    %383 = vmatpush1.bf16.msra.mxu0 %v339
    %384 = vmatprep.subr.bf16.mxu0 0
    %385 = vmatpush1.bf16.msra.mxu0 %v338
    %386 = vmatprep.subr.bf16.mxu0 0
    %387 = vmatpush2.bf16.msra.mxu0 %v353
    %388 = vmatprep.subr.bf16.mxu0 0
    %389 = vmatpush2.bf16.msra.mxu0 %v352
    %390 = vmatprep.subr.bf16.mxu0 0
    %391 = vmatpush2.bf16.msra.mxu0 %v351
    %392 = vmatprep.subr.bf16.mxu0 0
    %393 = vmatpush2.bf16.msra.mxu0 %v350
    %394 = vmatprep.subr.bf16.mxu0 0
    %395 = vmatpush2.bf16.msra.mxu0 %v349
    %396 = vmatprep.subr.bf16.mxu0 0
    %397 = vmatpush2.bf16.msra.mxu0 %v348
    %398 = vmatprep.subr.bf16.mxu0 0
    %399 = vmatpush2.bf16.msra.mxu0 %v347
    %400 = vmatprep.subr.bf16.mxu0 0
    %401 = vmatpush2.bf16.msra.mxu0 %v346
    %402 = vmatprep.mubr.bf16.mxu0 %v234
    %403 = vmatmul.mubr.bf16.gmra.mxu0 %v233
    %v404 = vpop.f32.mrf.mxu0
    %v405 = vadd.f32 %v272, %v404
    %v406 = vpop.f32.mrf.mxu0
    %v407 = vpop.f32.mrf.mxu0
    %v408 = vpop.f32.mrf.mxu0
    %409 = vdwg.mxu0
    %v410 = vmax.f32 %v405, 0.0
    %v411 = vpack.c.bf16 %v410, %v410
    %v412 = vld [vmem:[#allocation8] sm:$0xf]
    %v413 = vld [vmem:[#allocation8 + $0x4] sm:$0xf]
    %v414 = vld [vmem:[#allocation8 + $0x8] sm:$0xf]
    %v415 = vld [vmem:[#allocation8 + $0xc] sm:$0xf]
    %v416 = vld [vmem:[#allocation8 + $0x10] sm:$0xf]
    %v417 = vld [vmem:[#allocation8 + $0x14] sm:$0xf]
    %v418 = vld [vmem:[#allocation8 + $0x18] sm:$0xf]
    %v419 = vld [vmem:[#allocation8 + $0x1c] sm:$0xf]
    %v420 = vld [vmem:[#allocation8 + $0x20] sm:$0xf]
    %v421 = vld [vmem:[#allocation8 + $0x24] sm:$0xf]
    %v422 = vld [vmem:[#allocation8 + $0x28] sm:$0xf]
    %v423 = vld [vmem:[#allocation8 + $0x2c] sm:$0xf]
    %v424 = vld [vmem:[#allocation8 + $0x30] sm:$0xf]
    %v425 = vld [vmem:[#allocation8 + $0x34] sm:$0xf]
    %v426 = vld [vmem:[#allocation8 + $0x38] sm:$0xf]
    %v427 = vld [vmem:[#allocation8 + $0x3c] sm:$0xf]
    %v428 = vld [vmem:[%s6] sm:$0x1]
    %v430 = vlaneseq
    %v431 = vshrl.u32 %v430, 7
    %v432 = vsub.s32 0, %v431
    %v433 = vrot.slane %v428, %v432
    %v451 = vunpack.c.l.b16 %v412
    %v452 = vunpack.c.l.b16 %v413
    %v453 = vunpack.c.l.b16 %v414
    %v454 = vunpack.c.l.b16 %v415
    %v455 = vunpack.c.l.b16 %v416
    %v456 = vunpack.c.l.b16 %v417
    %v457 = vunpack.c.l.b16 %v418
    %v458 = vunpack.c.l.b16 %v419
    %v459 = vunpack.c.l.b16 %v420
    %v460 = vunpack.c.l.b16 %v421
    %v461 = vunpack.c.l.b16 %v422
    %v462 = vunpack.c.l.b16 %v423
    %v463 = vunpack.c.l.b16 %v424
    %v464 = vunpack.c.l.b16 %v425
    %v465 = vunpack.c.l.b16 %v426
    %v466 = vunpack.c.l.b16 %v427
    %v467 = vpack.c.b16 %v452, %v451
    %v468 = vpack.c.b16 %v454, %v453
    %v469 = vpack.c.b16 %v456, %v455
    %v470 = vpack.c.b16 %v458, %v457
    %v471 = vpack.c.b16 %v460, %v459
    %v472 = vpack.c.b16 %v462, %v461
    %v473 = vpack.c.b16 %v464, %v463
    %v474 = vpack.c.b16 %v466, %v465
    %483 = vmatprep.subr.bf16.mxu0 0
    %484 = vmatpush1.bf16.msra.mxu0 %v474
    %485 = vmatprep.subr.bf16.mxu0 0
    %486 = vmatpush1.bf16.msra.mxu0 %v473
    %487 = vmatprep.subr.bf16.mxu0 0
    %488 = vmatpush1.bf16.msra.mxu0 %v472
    %489 = vmatprep.subr.bf16.mxu0 0
    %490 = vmatpush1.bf16.msra.mxu0 %v471
    %491 = vmatprep.subr.bf16.mxu0 0
    %492 = vmatpush1.bf16.msra.mxu0 %v470
    %493 = vmatprep.subr.bf16.mxu0 0
    %494 = vmatpush1.bf16.msra.mxu0 %v469
    %495 = vmatprep.subr.bf16.mxu0 0
    %496 = vmatpush1.bf16.msra.mxu0 %v468
    %497 = vmatprep.subr.bf16.mxu0 0
    %498 = vmatpush1.bf16.msra.mxu0 %v467
    %499 = vmatprep.subr.bf16.mxu0 0
    %500 = vmatpush2.bf16.msra.mxu0 0
    %501 = vmatprep.subr.bf16.mxu0 0
    %502 = vmatpush2.bf16.msra.mxu0 0
    %503 = vmatprep.subr.bf16.mxu0 0
    %504 = vmatpush2.bf16.msra.mxu0 0
    %505 = vmatprep.subr.bf16.mxu0 0
    %506 = vmatpush2.bf16.msra.mxu0 0
    %507 = vmatprep.subr.bf16.mxu0 0
    %508 = vmatpush2.bf16.msra.mxu0 0
    %509 = vmatprep.subr.bf16.mxu0 0
    %510 = vmatpush2.bf16.msra.mxu0 0
    %511 = vmatprep.subr.bf16.mxu0 0
    %512 = vmatpush2.bf16.msra.mxu0 0
    %513 = vmatprep.subr.bf16.mxu0 0
    %514 = vmatpush2.bf16.msra.mxu0 0
    %515 = vmatprep.mubr.bf16.mxu0 0
    %516 = vmatmul.mubr.bf16.gmra.mxu0 %v411
    %v517 = vpop.f32.mrf.mxu0
    %v518 = vadd.f32 %v433, %v517
    %v519 = vpop.f32.mrf.mxu0
    %v520 = vpop.f32.mrf.mxu0
    %v521 = vpop.f32.mrf.mxu0
    %522 = vdwg.mxu0
    %523 = vst [vmem:[#allocation10] sm:$0xff] %v518
    // Predicated region
    $region46: #{tpu_custom_call.1} parent=1 // pred_check
      _
    $region47: #{tpu_custom_call.1} parent=1 // pred_check_branch
      %525 = sbr.rel (0) target = $region49
    $region48: #{tpu_custom_call.1} parent=1 // pred_region
      %s527 = ssub.s32 128, 128
      %528 = vsyncadd [#allocation4], %s527
      %s530 = sshll.u32 [#allocation10], 4
      %s531 = int_to_ptr.vmem [resolvable:$true] %s530
      %533 = dma.vmem_to_hbm [thread:$0]  %s531, 128, %s7, [#allocation4]
    $region49: #{tpu_custom_call.1} parent=1 // pred_fallthru
      _
    // Predicated region
    $region50: #{tpu_custom_call.1} parent=1 // pred_check
      _
    $region51: #{tpu_custom_call.1} parent=1 // pred_check_branch
      %535 = sbr.rel (0) target = $region53
    $region52: #{tpu_custom_call.1} parent=1 // pred_region
      %536 = dma.done [#allocation4], 128
    $region53: #{tpu_custom_call.1} parent=1 // pred_fallthru
      _
    %537 = vsyncpa [#allocation3], 1
    %538 = vsyncpa [#allocation6], 1
    %539 = vsyncpa [#allocation9], 1
    %540 = vsyncpa [#allocation4], 1

</llo_original>
